<compile_context>
chip_gen: v6e
topology: v6e:2x2x1
jax: 0.10.0
libtpu: 0.0.40
codegen_flags: <defaults>
</compile_context>

<pallas_src>
import functools

import numpy as np
import jax
import jax.numpy as jnp
from jax.experimental import pallas as pl
from jax.experimental.pallas import tpu as pltpu


# ----------------------------- problem sizes -----------------------------
# Original: n_inputs=943, n_outputs=4760, N_TRAIN=2921, hidden/dropout from argv.
# Small, shape-consistent stand-ins:
N_INPUTS = 96
N_HIDDEN = 32
N_OUTPUTS = 320
N_TRAIN = 50
DROPOUT_RATE = 0.1
N_PARTICLES = 3

PARAM_DIM = N_INPUTS * N_HIDDEN + N_HIDDEN + N_HIDDEN * N_OUTPUTS + N_OUTPUTS


def _round_up(x, m):
    return (x + m - 1) // m * m


# ----------------------------- tiling constants ---------------------------
TILE_B = 64                       # batch tile (sublane axis), multiple of 8
TILE_N = 128                      # fc2 output tile (lane axis)

K_PAD = _round_up(N_INPUTS, 128)  # contraction dim of fc1
H_PAD = _round_up(N_HIDDEN, 128)  # hidden dim (contraction dim of fc2)
N_PAD = _round_up(N_OUTPUTS, TILE_N)
B_PAD = _round_up(N_TRAIN, TILE_B)
NB = B_PAD // TILE_B              # number of batch tiles
NO = N_PAD // TILE_N              # number of output tiles


# ------------------------------- kernel ----------------------------------
def _pso_mlp_mae_kernel(x_ref, y_ref, w1_ref, b1_ref, w2_ref, b2_ref, drop_ref,
                        out_ref, h_ref, acc_ref, *, n_train, tile_b):
    b = pl.program_id(1)
    o = pl.program_id(2)

    # ---- fc1 + tanh + dropout: once per (particle, batch-tile), reused over o
    @pl.when(o == 0)
    def _():
        pre = jnp.dot(x_ref[...], w1_ref[0],
                      preferred_element_type=jnp.float32) + b1_ref[0]
        h = jnp.tanh(pre) * drop_ref[0]          # f32 elementwise path
        h_ref[...] = h.astype(h_ref.dtype)       # bf16 for the second MXU pass
        acc_ref[...] = jnp.zeros_like(acc_ref)

    # ---- fc2 for this output tile (bf16 inputs, f32 accumulate)
    pred = jnp.dot(h_ref[...], w2_ref[0],
                   preferred_element_type=jnp.float32) + b2_ref[0]

    # Mask padded batch rows (bias makes their pred non-zero); padded output
    # lanes are exact zeros by construction (zero-padded W2/b2/Y), no mask needed.
    row = jax.lax.broadcasted_iota(jnp.int32, (tile_b, 1), 0) + b * tile_b
    valid = (row < n_train).astype(jnp.float32)
    acc_ref[...] += jnp.abs(pred - y_ref[...]) * valid

    # ---- finalize: fold the batch-tile rows down to lane-dense (8, TILE_N)
    @pl.when(o == pl.num_programs(2) - 1)
    def _():
        acc = acc_ref[...]
        folded = acc[0:8, :]
        for r in range(1, tile_b // 8):
            folded = folded + acc[r * 8:(r + 1) * 8, :]
        out_ref[0, 0, :, :] = folded


def make_pso_mae_fn():
    kernel = functools.partial(_pso_mlp_mae_kernel, n_train=N_TRAIN,
                               tile_b=TILE_B)

    call = pl.pallas_call(
        kernel,
        out_shape=jax.ShapeDtypeStruct((N_PARTICLES, NB, 8, TILE_N), jnp.float32),
        grid_spec=pltpu.PrefetchScalarGridSpec(
            num_scalar_prefetch=0,
            grid=(N_PARTICLES, NB, NO),
            in_specs=[
                pl.BlockSpec((TILE_B, K_PAD), lambda p, b, o: (b, 0)),        # X
                pl.BlockSpec((TILE_B, TILE_N), lambda p, b, o: (b, o)),       # Y
                pl.BlockSpec((1, K_PAD, H_PAD), lambda p, b, o: (p, 0, 0)),   # W1
                pl.BlockSpec((1, 1, H_PAD), lambda p, b, o: (p, 0, 0)),       # b1
                pl.BlockSpec((1, H_PAD, TILE_N), lambda p, b, o: (p, 0, o)),  # W2
                pl.BlockSpec((1, 1, TILE_N), lambda p, b, o: (p, 0, o)),      # b2
                pl.BlockSpec((1, TILE_B, H_PAD), lambda p, b, o: (p, b, 0)),  # drop
            ],
            out_specs=pl.BlockSpec((1, 1, 8, TILE_N),
                                   lambda p, b, o: (p, b, 0, 0)),
            scratch_shapes=[
                pltpu.VMEM((TILE_B, H_PAD), jnp.bfloat16),   # hoisted fc1 output
                pltpu.VMEM((TILE_B, TILE_N), jnp.float32),   # |err| accumulator
            ],
        ),
        compiler_params=pltpu.CompilerParams(
            dimension_semantics=("parallel", "parallel", "arbitrary"),
            vmem_limit_bytes=32 * 1024 * 1024,
        ),
    )

    def _unpack_particles(positions):
        """Batched Network_PSO.vecToMat for all particles, padded + bf16."""
        o1 = N_INPUTS * N_HIDDEN
        o2 = o1 + N_HIDDEN
        o3 = o2 + N_HIDDEN * N_OUTPUTS
        o4 = o3 + N_OUTPUTS
        w1_t = positions[:, 0:o1].reshape(N_PARTICLES, N_HIDDEN, N_INPUTS)
        b1 = positions[:, o1:o2].reshape(N_PARTICLES, 1, N_HIDDEN)
        w2_t = positions[:, o2:o3].reshape(N_PARTICLES, N_OUTPUTS, N_HIDDEN)
        b2 = positions[:, o3:o4].reshape(N_PARTICLES, 1, N_OUTPUTS)
        w1 = jnp.transpose(w1_t, (0, 2, 1))          # (P, K, H) right-multiply
        w2 = jnp.transpose(w2_t, (0, 2, 1))          # (P, H, N)
        w1 = jnp.pad(w1, ((0, 0), (0, K_PAD - N_INPUTS),
                          (0, H_PAD - N_HIDDEN))).astype(jnp.bfloat16)
        b1 = jnp.pad(b1, ((0, 0), (0, 0), (0, H_PAD - N_HIDDEN)))
        w2 = jnp.pad(w2, ((0, 0), (0, H_PAD - N_HIDDEN),
                          (0, N_PAD - N_OUTPUTS))).astype(jnp.bfloat16)
        b2 = jnp.pad(b2, ((0, 0), (0, 0), (0, N_PAD - N_OUTPUTS)))
        return w1, b1, w2, b2

    @jax.jit
    def run(positions, x_pad_bf16, y_pad, drop_mask):
        w1, b1, w2, b2 = _unpack_particles(positions)
        partials = call(x_pad_bf16, y_pad, w1, b1, w2, b2, drop_mask)
        # fused normalisation: sum(|err|) / (N_TRAIN * n_outputs)
        return jnp.sum(partials, axis=(1, 2, 3)) / jnp.float32(N_TRAIN * N_OUTPUTS)

    return run


# --------------------------- PSO forward glue -----------------------------
def network_pso_forward(params, localbcosts, mae_fn,
                        positions, x_pad_bf16, y_pad, drop_mask):
    """Reproduces Network_PSO.forward: returns (pos_best_g, errg_best, params)."""
    localbcosts = np.array(localbcosts, dtype=np.float32)
    errg_best = float(localbcosts[int(np.argmin(localbcosts))])
    pos_best_g = np.zeros(params.shape[2], dtype=np.float32)

    # one kernel launch for the whole swarm, one device->host sync
    maes = np.asarray(jax.block_until_ready(
        mae_fn(positions, x_pad_bf16, y_pad, drop_mask)))

    for i in range(params.shape[0]):
        mae = float(maes[i])
        if mae < localbcosts[i] or localbcosts[i] == -1:
            localbcosts[i] = mae
            params[i][1] = np.copy(params[i][0])
        if mae < errg_best or errg_best == -1:
            errg_best = mae
            pos_best_g = np.copy(params[i][0])
    return pos_best_g, errg_best, params


# --------------------------------- main -----------------------------------
if __name__ == "__main__":
    key = jax.random.PRNGKey(0)
    k_x, k_y, k_p, k_d = jax.random.split(key, 4)

    # synthetic "training set" (stand-in for X_train / Y_train)
    x_train = jax.random.normal(k_x, (N_TRAIN, N_INPUTS), dtype=jnp.float32)
    y_train = jax.random.normal(k_y, (N_TRAIN, N_OUTPUTS), dtype=jnp.float32)

    # particles: (n_particles, 2, PARAM_DIM) — slot 0 = position, slot 1 = best
    params = np.asarray(
        jax.random.normal(k_p, (N_PARTICLES, 2, PARAM_DIM), dtype=jnp.float32)
    ) * 0.1
    localbcosts = np.full((N_PARTICLES,), -1.0, dtype=np.float32)

    # padded, lane-dense kernel inputs (built once, reused every generation)
    x_pad_bf16 = jnp.pad(
        x_train, ((0, B_PAD - N_TRAIN), (0, K_PAD - N_INPUTS))
    ).astype(jnp.bfloat16)
    y_pad = jnp.pad(y_train, ((0, B_PAD - N_TRAIN), (0, N_PAD - N_OUTPUTS)))

    # training-mode dropout: fresh Bernoulli mask per particle, 1/(1-p) scaling
    keep = jax.random.bernoulli(k_d, 1.0 - DROPOUT_RATE,
                                (N_PARTICLES, B_PAD, H_PAD))
    drop_mask = keep.astype(jnp.float32) / jnp.float32(1.0 - DROPOUT_RATE)

    positions = jnp.asarray(params[:, 0, :], dtype=jnp.float32)

    mae_fn = make_pso_mae_fn()
    pos_best_g, errg_best, params_out = network_pso_forward(
        params, localbcosts, mae_fn, positions, x_pad_bf16, y_pad, drop_mask)

    # ---- correctness check against a plain-JAX reference (same bf16 math) ----
    def ref_mae(pos_i, mask_i):
        o1 = N_INPUTS * N_HIDDEN
        o2 = o1 + N_HIDDEN
        o3 = o2 + N_HIDDEN * N_OUTPUTS
        w1 = pos_i[0:o1].reshape(N_HIDDEN, N_INPUTS).T.astype(jnp.bfloat16)
        b1 = pos_i[o1:o2]
        w2 = pos_i[o2:o3].reshape(N_OUTPUTS, N_HIDDEN).T.astype(jnp.bfloat16)
        b2 = pos_i[o3:]
        h = jnp.tanh(jnp.dot(x_train.astype(jnp.bfloat16), w1,
                             preferred_element_type=jnp.float32) + b1)
        h = h * mask_i[:N_TRAIN, :N_HIDDEN]
        h = h.astype(jnp.bfloat16)
        pred = jnp.dot(h, w2, preferred_element_type=jnp.float32) + b2
        return jnp.sum(jnp.sum(jnp.abs(pred - y_train), axis=0) / N_TRAIN) / N_OUTPUTS

    maes_kernel = np.asarray(mae_fn(positions, x_pad_bf16, y_pad, drop_mask))
    maes_ref = np.asarray([ref_mae(positions[i], drop_mask[i])
                           for i in range(N_PARTICLES)])
    np.testing.assert_allclose(maes_kernel, maes_ref, rtol=5e-2, atol=1e-3)

    assert np.isfinite(errg_best)
    assert pos_best_g.shape == (PARAM_DIM,)
    assert params_out.shape == (N_PARTICLES, 2, PARAM_DIM)

    print("KERNEL_OK")
</pallas_src>

<mosaic_0001>
module attributes {stable_mosaic.version = 11 : i64} {
  func.func @_pso_mlp_mae_kernel(%arg0: i32, %arg1: i32, %arg2: i32, %arg3: memref<64x128xbf16, #tpu.memory_space<vmem>>, %arg4: memref<64x128xf32, #tpu.memory_space<vmem>>, %arg5: memref<1x128x128xbf16, #tpu.memory_space<vmem>>, %arg6: memref<1x1x128xf32, #tpu.memory_space<vmem>>, %arg7: memref<1x128x128xbf16, #tpu.memory_space<vmem>>, %arg8: memref<1x1x128xf32, #tpu.memory_space<vmem>>, %arg9: memref<1x64x128xf32, #tpu.memory_space<vmem>>, %arg10: memref<1x1x8x128xf32, #tpu.memory_space<vmem>>, %arg11: memref<64x128xbf16, #tpu.memory_space<vmem>>, %arg12: memref<64x128xf32, #tpu.memory_space<vmem>>) attributes {dimension_semantics = [#tpu.dimension_semantics<parallel>, #tpu.dimension_semantics<parallel>, #tpu.dimension_semantics<arbitrary>], iteration_bounds = array<i64: 3, 1, 3>, scalar_prefetch = 0 : i64, scratch_operands = 2 : i64, tpu.core_type = #tpu.core_type<tc>, window_params = [{transform_indices = @transform_0, window_bounds = array<i64: 64, 128>}, {transform_indices = @transform_1, window_bounds = array<i64: 64, 128>}, {transform_indices = @transform_2, window_bounds = array<i64: 1, 128, 128>}, {transform_indices = @transform_3, window_bounds = array<i64: 1, 1, 128>}, {transform_indices = @transform_4, window_bounds = array<i64: 1, 128, 128>}, {transform_indices = @transform_5, window_bounds = array<i64: 1, 1, 128>}, {transform_indices = @transform_6, window_bounds = array<i64: 1, 64, 128>}, {transform_indices = @transform_7, window_bounds = array<i64: 1, 1, 8, 128>}]} {
    %c0_i32 = arith.constant 0 : i32
    %0 = arith.cmpi eq, %arg2, %c0_i32 : i32
    %1 = arith.extui %0 : i1 to i32
    %c0_i32_0 = arith.constant 0 : i32
    %2 = arith.cmpi ne, %1, %c0_i32_0 : i32
    scf.if %2 {
      %c0_15 = arith.constant 0 : index
      %c0_16 = arith.constant 0 : index
      %30 = vector.load %arg3[%c0_15, %c0_16] : memref<64x128xbf16, #tpu.memory_space<vmem>>, vector<64x128xbf16>
      %c0_17 = arith.constant 0 : index
      %c0_18 = arith.constant 0 : index
      %c0_19 = arith.constant 0 : index
      %31 = vector.load %arg5[%c0_17, %c0_18, %c0_19] : memref<1x128x128xbf16, #tpu.memory_space<vmem>>, vector<1x128x128xbf16>
      %32 = vector.shape_cast %31 : vector<1x128x128xbf16> to vector<128x128xbf16>
      %cst_20 = arith.constant dense<0.000000e+00> : vector<64x128xf32>
      %33 = tpu.matmul %30, %32, %cst_20 {dimension_numbers = #tpu.dot_dimension_numbers<[1], [0], [0], [1], [0, 0, 1, 1], [], []>} : vector<64x128xbf16>, vector<128x128xbf16>, vector<64x128xf32> -> vector<64x128xf32>
      %c0_21 = arith.constant 0 : index
      %c0_22 = arith.constant 0 : index
      %c0_23 = arith.constant 0 : index
      %34 = vector.load %arg6[%c0_21, %c0_22, %c0_23] : memref<1x1x128xf32, #tpu.memory_space<vmem>>, vector<1x1x128xf32>
      %35 = vector.shape_cast %34 : vector<1x1x128xf32> to vector<1x128xf32>
      %36 = vector.broadcast %35 : vector<1x128xf32> to vector<64x128xf32>
      %37 = arith.addf %33, %36 : vector<64x128xf32>
      %38 = math.tanh %37 : vector<64x128xf32>
      %c0_24 = arith.constant 0 : index
      %c0_25 = arith.constant 0 : index
      %c0_26 = arith.constant 0 : index
      %39 = vector.load %arg9[%c0_24, %c0_25, %c0_26] : memref<1x64x128xf32, #tpu.memory_space<vmem>>, vector<1x64x128xf32>
      %40 = vector.shape_cast %39 : vector<1x64x128xf32> to vector<64x128xf32>
      %41 = arith.mulf %38, %40 : vector<64x128xf32>
      %42 = arith.truncf %41 : vector<64x128xf32> to vector<64x128xbf16>
      %c0_27 = arith.constant 0 : index
      %c0_28 = arith.constant 0 : index
      %43 = vector.load %arg11[%c0_27, %c0_28] : memref<64x128xbf16, #tpu.memory_space<vmem>>, vector<64x128xbf16>
      tpu.vector_store %arg11[%c0_27, %c0_28], %42 {strides = array<i32>} : memref<64x128xbf16, #tpu.memory_space<vmem>>, vector<64x128xbf16>,
      %cst_29 = arith.constant 0.000000e+00 : f32
      %44 = vector.broadcast %cst_29 : f32 to vector<64x128xf32>
      %c0_30 = arith.constant 0 : index
      %c0_31 = arith.constant 0 : index
      %45 = vector.load %arg12[%c0_30, %c0_31] : memref<64x128xf32, #tpu.memory_space<vmem>>, vector<64x128xf32>
      tpu.vector_store %arg12[%c0_30, %c0_31], %44 {strides = array<i32>} : memref<64x128xf32, #tpu.memory_space<vmem>>, vector<64x128xf32>,
    } else {
    }
    %c0 = arith.constant 0 : index
    %c0_1 = arith.constant 0 : index
    %3 = vector.load %arg11[%c0, %c0_1] : memref<64x128xbf16, #tpu.memory_space<vmem>>, vector<64x128xbf16>
    %c0_2 = arith.constant 0 : index
    %c0_3 = arith.constant 0 : index
    %c0_4 = arith.constant 0 : index
    %4 = vector.load %arg7[%c0_2, %c0_3, %c0_4] : memref<1x128x128xbf16, #tpu.memory_space<vmem>>, vector<1x128x128xbf16>
    %5 = vector.shape_cast %4 : vector<1x128x128xbf16> to vector<128x128xbf16>
    %cst = arith.constant dense<0.000000e+00> : vector<64x128xf32>
    %6 = tpu.matmul %3, %5, %cst {dimension_numbers = #tpu.dot_dimension_numbers<[1], [0], [0], [1], [0, 0, 1, 1], [], []>} : vector<64x128xbf16>, vector<128x128xbf16>, vector<64x128xf32> -> vector<64x128xf32>
    %c0_5 = arith.constant 0 : index
    %c0_6 = arith.constant 0 : index
    %c0_7 = arith.constant 0 : index
    %7 = vector.load %arg8[%c0_5, %c0_6, %c0_7] : memref<1x1x128xf32, #tpu.memory_space<vmem>>, vector<1x1x128xf32>
    %8 = vector.shape_cast %7 : vector<1x1x128xf32> to vector<1x128xf32>
    %9 = vector.broadcast %8 : vector<1x128xf32> to vector<64x128xf32>
    %10 = arith.addf %6, %9 : vector<64x128xf32>
    %11 = tpu.iota {dimensions = array<i32: 0>} : vector<64x1xi32>
    %c64_i32 = arith.constant 64 : i32
    %12 = arith.muli %arg1, %c64_i32 : i32
    %13 = vector.broadcast %12 : i32 to vector<64x1xi32>
    %14 = arith.addi %11, %13 : vector<64x1xi32>
    %c50_i32 = arith.constant 50 : i32
    %15 = vector.broadcast %c50_i32 : i32 to vector<64x1xi32>
    %16 = arith.cmpi slt, %14, %15 : vector<64x1xi32>
    %17 = arith.extui %16 : vector<64x1xi1> to vector<64x1xi32>
    %18 = arith.sitofp %17 : vector<64x1xi32> to vector<64x1xf32>
    %c0_8 = arith.constant 0 : index
    %c0_9 = arith.constant 0 : index
    %19 = vector.load %arg12[%c0_8, %c0_9] : memref<64x128xf32, #tpu.memory_space<vmem>>, vector<64x128xf32>
    %c0_10 = arith.constant 0 : index
    %c0_11 = arith.constant 0 : index
    %20 = vector.load %arg4[%c0_10, %c0_11] : memref<64x128xf32, #tpu.memory_space<vmem>>, vector<64x128xf32>
    %21 = arith.subf %10, %20 : vector<64x128xf32>
    %22 = math.absf %21 : vector<64x128xf32>
    %23 = vector.broadcast %18 : vector<64x1xf32> to vector<64x128xf32>
    %24 = arith.mulf %22, %23 : vector<64x128xf32>
    %25 = arith.addf %19, %24 : vector<64x128xf32>
    %c0_12 = arith.constant 0 : index
    %c0_13 = arith.constant 0 : index
    %26 = vector.load %arg12[%c0_12, %c0_13] : memref<64x128xf32, #tpu.memory_space<vmem>>, vector<64x128xf32>
    tpu.vector_store %arg12[%c0_12, %c0_13], %25 {strides = array<i32>} : memref<64x128xf32, #tpu.memory_space<vmem>>, vector<64x128xf32>,
    %c2_i32 = arith.constant 2 : i32
    %27 = arith.cmpi eq, %arg2, %c2_i32 : i32
    %28 = arith.extui %27 : i1 to i32
    %c0_i32_14 = arith.constant 0 : i32
    %29 = arith.cmpi ne, %28, %c0_i32_14 : i32
    scf.if %29 {
      %c0_15 = arith.constant 0 : index
      %c0_16 = arith.constant 0 : index
      %30 = vector.load %arg12[%c0_15, %c0_16] : memref<64x128xf32, #tpu.memory_space<vmem>>, vector<64x128xf32>
      %31 = vector.extract_strided_slice %30 {offsets = [0, 0], sizes = [8, 128], strides = [1, 1]} : vector<64x128xf32> to vector<8x128xf32>
      %32 = vector.extract_strided_slice %30 {offsets = [8, 0], sizes = [8, 128], strides = [1, 1]} : vector<64x128xf32> to vector<8x128xf32>
      %33 = arith.addf %31, %32 : vector<8x128xf32>
      %34 = vector.extract_strided_slice %30 {offsets = [16, 0], sizes = [8, 128], strides = [1, 1]} : vector<64x128xf32> to vector<8x128xf32>
      %35 = arith.addf %33, %34 : vector<8x128xf32>
      %36 = vector.extract_strided_slice %30 {offsets = [24, 0], sizes = [8, 128], strides = [1, 1]} : vector<64x128xf32> to vector<8x128xf32>
      %37 = arith.addf %35, %36 : vector<8x128xf32>
      %38 = vector.extract_strided_slice %30 {offsets = [32, 0], sizes = [8, 128], strides = [1, 1]} : vector<64x128xf32> to vector<8x128xf32>
      %39 = arith.addf %37, %38 : vector<8x128xf32>
      %40 = vector.extract_strided_slice %30 {offsets = [40, 0], sizes = [8, 128], strides = [1, 1]} : vector<64x128xf32> to vector<8x128xf32>
      %41 = arith.addf %39, %40 : vector<8x128xf32>
      %42 = vector.extract_strided_slice %30 {offsets = [48, 0], sizes = [8, 128], strides = [1, 1]} : vector<64x128xf32> to vector<8x128xf32>
      %43 = arith.addf %41, %42 : vector<8x128xf32>
      %44 = vector.extract_strided_slice %30 {offsets = [56, 0], sizes = [8, 128], strides = [1, 1]} : vector<64x128xf32> to vector<8x128xf32>
      %45 = arith.addf %43, %44 : vector<8x128xf32>
      %c0_17 = arith.constant 0 : index
      %c0_18 = arith.constant 0 : index
      %c0_19 = arith.constant 0 : index
      %c0_20 = arith.constant 0 : index
      %46 = vector.load %arg10[%c0_17, %c0_18, %c0_19, %c0_20] : memref<1x1x8x128xf32, #tpu.memory_space<vmem>>, vector<1x1x8x128xf32>
      %47 = vector.shape_cast %46 : vector<1x1x8x128xf32> to vector<8x128xf32>
      %48 = vector.shape_cast %45 : vector<8x128xf32> to vector<1x1x8x128xf32>
      tpu.vector_store %arg10[%c0_17, %c0_18, %c0_19, %c0_20], %48 {strides = array<i32>} : memref<1x1x8x128xf32, #tpu.memory_space<vmem>>, vector<1x1x8x128xf32>,
    } else {
    }
    return
  }
  func.func @transform_0(%arg0: i32, %arg1: i32, %arg2: i32) -> (i32, i32) {
    %c0_i32 = arith.constant 0 : i32
    %c0_i32_0 = arith.constant 0 : i32
    return %arg1, %c0_i32 : i32, i32
  }
  func.func @transform_1(%arg0: i32, %arg1: i32, %arg2: i32) -> (i32, i32) {
    %c0_i32 = arith.constant 0 : i32
    return %arg1, %arg2 : i32, i32
  }
  func.func @transform_2(%arg0: i32, %arg1: i32, %arg2: i32) -> (i32, i32, i32) {
    %c0_i32 = arith.constant 0 : i32
    %c0_i32_0 = arith.constant 0 : i32
    %c0_i32_1 = arith.constant 0 : i32
    return %arg0, %c0_i32, %c0_i32_0 : i32, i32, i32
  }
  func.func @transform_3(%arg0: i32, %arg1: i32, %arg2: i32) -> (i32, i32, i32) {
    %c0_i32 = arith.constant 0 : i32
    %c0_i32_0 = arith.constant 0 : i32
    %c0_i32_1 = arith.constant 0 : i32
    return %arg0, %c0_i32, %c0_i32_0 : i32, i32, i32
  }
  func.func @transform_4(%arg0: i32, %arg1: i32, %arg2: i32) -> (i32, i32, i32) {
    %c0_i32 = arith.constant 0 : i32
    %c0_i32_0 = arith.constant 0 : i32
    return %arg0, %c0_i32, %arg2 : i32, i32, i32
  }
  func.func @transform_5(%arg0: i32, %arg1: i32, %arg2: i32) -> (i32, i32, i32) {
    %c0_i32 = arith.constant 0 : i32
    %c0_i32_0 = arith.constant 0 : i32
    return %arg0, %c0_i32, %arg2 : i32, i32, i32
  }
  func.func @transform_6(%arg0: i32, %arg1: i32, %arg2: i32) -> (i32, i32, i32) {
    %c0_i32 = arith.constant 0 : i32
    %c0_i32_0 = arith.constant 0 : i32
    return %arg0, %arg1, %c0_i32 : i32, i32, i32
  }
  func.func @transform_7(%arg0: i32, %arg1: i32, %arg2: i32) -> (i32, i32, i32, i32) {
    %c0_i32 = arith.constant 0 : i32
    %c0_i32_0 = arith.constant 0 : i32
    %c0_i32_1 = arith.constant 0 : i32
    return %arg0, %arg1, %c0_i32, %c0_i32_0 : i32, i32, i32, i32
  }
}

</mosaic_0001>

<llo_original>
// kernel: run.1
$region0: #{run.1}
  #allocation0 [shape = 'u32[]', space=smem, size = 0x4, offset = 0x4, fixed_abs, tag = 'smem constant byte address 0x4 - core index']
  #allocation1 [shape = 'u32[144,128]{1,0:T(1,128)}', space=vmem, size = 0x12000, scoped, tag = 'internal scratch']
  #allocation2 [shape = 'bf16[64,128]{1,0:T(8,128)(2,1)}', space=vmem, size = 0x4000, scoped, tag = 'scratch operand']
  #allocation3 [shape = 'f32[64,128]{1,0:T(8,128)}', space=vmem, size = 0x8000, scoped, tag = 'scratch operand']
  %s0 = inlined_call_operand.vmem [shape: bf16[64,128], index: 0, kind: input, shape index: {}]
  %s1 = inlined_call_operand.vmem [shape: f32[64,384], index: 1, kind: input, shape index: {}]
  %s2 = inlined_call_operand.vmem [shape: bf16[3,128,128], index: 2, kind: input, shape index: {}]
  %s3 = inlined_call_operand.vmem [shape: f32[3,1,128], index: 3, kind: input, shape index: {}]
  %s4 = inlined_call_operand.vmem [shape: bf16[3,128,384], index: 4, kind: input, shape index: {}]
  %s5 = inlined_call_operand.vmem [shape: f32[3,1,384], index: 5, kind: input, shape index: {}]
  %s6 = inlined_call_operand.vmem [shape: f32[3,64,128], index: 6, kind: input, shape index: {}]
  %s7 = inlined_call_operand.vmem [shape: f32[3,1,8,128], index: 7, kind: output, shape index: {}]
  %s8 = sld [smem:[#allocation0]]
  $region148: #{run.1} parent=0
    _
  %s10 = ssub.s32 1, %s8
  %s11 = scalar_select 0, %s10, %s8
  $region1: #{run.1} parent=0
    #allocation4 [shape = 'u8[65536]{0}', space=vmem, size = 0x10000, scoped, tag = 'input window, operand 1']
    #allocation5 [shape = 'u8[65536]{0}', space=vmem, size = 0x10000, scoped, tag = 'input window, operand 4']
    loop: start=0, step=1, limit=11
    $region2: #{run.1} parent=1 // loop_pre_header
      _
    $region3: #{run.1} parent=1 // loop_header
      %s13 = sphi 0, %s17
      %p14 = scmp.ge.s32.totalorder %s13, 11
      %s20 = sphi 0, %s39
      %s21 = sphi 0, %s35
      %s22 = sphi 0, %s31
      %s23 = sphi 0, %s20
      %s24 = sphi 0, %s21
      %s25 = sphi 0, %s22
      %s26 = sphi 0, %s23
      %s27 = sphi 0, %s24
      %s28 = sphi 0, %s25
      %s42 = sphi 0, %s44
      %s45 = sphi 0, %s42
      %s46 = sphi 0, %s45
      %s62 = sphi 0, %s46
      %s70 = sphi 0, %s72
      %s73 = sphi 0, %s70
      %s74 = sphi 0, %s73
      %s90 = sphi 0, %s74
      %s96 = sphi 0, %s98
      %s99 = sphi 0, %s96
      %s100 = sphi 0, %s99
      %s116 = sphi 0, %s100
      %s122 = sphi 0, %s124
      %s125 = sphi 0, %s122
      %s126 = sphi 0, %s125
      %s142 = sphi 0, %s126
      %s150 = sphi 0, %s152
      %s153 = sphi 0, %s150
      %s154 = sphi 0, %s153
      %s170 = sphi 0, %s154
      %s178 = sphi 0, %s180
      %s181 = sphi 0, %s178
      %s182 = sphi 0, %s181
      %s198 = sphi 0, %s182
      %s206 = sphi 0, %s208
      %s209 = sphi 0, %s206
      %s210 = sphi 0, %s209
      %s226 = sphi 0, %s210
      %s234 = sphi 0, %s236
      %s237 = sphi 0, %s234
      %s238 = sphi 0, %s237
      %s254 = sphi 0, %s238
    $region4: #{run.1} parent=1 // loop_header_branch
      %16 = sbr.rel (%p14) target = $region8
    $region5: #{run.1} parent=1 // loop_body
      %s18 = ssub.s32 %s13, 1
      %s19 = ssub.s32 %s13, 2
      %s29 = sadd.s32 1, %s22
      %p30 = scmp.ge.s32.totalorder %s29, 3
      %s31 = scalar_select %p30, 0, %s29
      %s32 = sadd.s32 1, %s21
      %s33 = scalar_select %p30, %s32, %s21
      %p34 = scmp.ge.s32.totalorder %s33, 1
      %s35 = scalar_select %p34, 0, %s33
      %s36 = sadd.s32 1, %s20
      %s37 = scalar_select %p34, %s36, %s20
      %p38 = scmp.ge.s32.totalorder %s37, 3
      %s39 = scalar_select %p38, 0, %s37
      %s40 = ssub.s32 %s21, %s35
      %p41 = scmp.eq.s32.totalorder %s40, 0
      %s43 = sadd.s32 %s42, 1
      %s44 = scalar_select %p41, %s42, %s43
      %p47 = pneg %p41
      %p48 = scmp.eq.s32.totalorder %s13, 8
      %p49 = por %p47, %p48
      %p50 = scmp.ne.s32.totalorder %s42, %s45
      %p51 = scmp.eq.s32.totalorder %s13, 0
      %p52 = por %p50, %p51
      %p53 = scmp.ne.s32.totalorder %s42, %s45
      %p54 = scmp.eq.s32.totalorder %s18, 8
      %p55 = por %p53, %p54
      %p56 = scmp.ne.s32.totalorder %s45, %s46
      %p57 = scmp.eq.s32.totalorder %s18, 0
      %p58 = por %p56, %p57
      %p59 = scmp.ne.s32.totalorder %s45, %s46
      %p60 = scmp.eq.s32.totalorder %s19, 8
      %p61 = por %p59, %p60
      %p63 = scmp.ne.s32.totalorder %s46, %s62
      %p64 = scmp.eq.s32.totalorder %s19, 0
      %p65 = por %p63, %p64
      %s66 = ssub.s32 %s21, %s35
      %s67 = ssub.s32 %s22, %s31
      %s68 = sor.u32 %s66, %s67
      %p69 = scmp.eq.s32.totalorder %s68, 0
      %s71 = sadd.s32 %s70, 1
      %s72 = scalar_select %p69, %s70, %s71
      %p75 = pneg %p69
      %p76 = scmp.eq.s32.totalorder %s13, 8
      %p77 = por %p75, %p76
      %p78 = scmp.ne.s32.totalorder %s70, %s73
      %p79 = scmp.eq.s32.totalorder %s13, 0
      %p80 = por %p78, %p79
      %p81 = scmp.ne.s32.totalorder %s70, %s73
      %p82 = scmp.eq.s32.totalorder %s18, 8
      %p83 = por %p81, %p82
      %p84 = scmp.ne.s32.totalorder %s73, %s74
      %p85 = scmp.eq.s32.totalorder %s18, 0
      %p86 = por %p84, %p85
      %p87 = scmp.ne.s32.totalorder %s73, %s74
      %p88 = scmp.eq.s32.totalorder %s19, 8
      %p89 = por %p87, %p88
      %p91 = scmp.ne.s32.totalorder %s74, %s90
      %p92 = scmp.eq.s32.totalorder %s19, 0
      %p93 = por %p91, %p92
      %s94 = ssub.s32 %s20, %s39
      %p95 = scmp.eq.s32.totalorder %s94, 0
      %s97 = sadd.s32 %s96, 1
      %s98 = scalar_select %p95, %s96, %s97
      %p101 = pneg %p95
      %p102 = scmp.eq.s32.totalorder %s13, 8
      %p103 = por %p101, %p102
      %p104 = scmp.ne.s32.totalorder %s96, %s99
      %p105 = scmp.eq.s32.totalorder %s13, 0
      %p106 = por %p104, %p105
      %p107 = scmp.ne.s32.totalorder %s96, %s99
      %p108 = scmp.eq.s32.totalorder %s18, 8
      %p109 = por %p107, %p108
      %p110 = scmp.ne.s32.totalorder %s99, %s100
      %p111 = scmp.eq.s32.totalorder %s18, 0
      %p112 = por %p110, %p111
      %p113 = scmp.ne.s32.totalorder %s99, %s100
      %p114 = scmp.eq.s32.totalorder %s19, 8
      %p115 = por %p113, %p114
      %p117 = scmp.ne.s32.totalorder %s100, %s116
      %p118 = scmp.eq.s32.totalorder %s19, 0
      %p119 = por %p117, %p118
      %s120 = ssub.s32 %s20, %s39
      %p121 = scmp.eq.s32.totalorder %s120, 0
      %s123 = sadd.s32 %s122, 1
      %s124 = scalar_select %p121, %s122, %s123
      %p127 = pneg %p121
      %p128 = scmp.eq.s32.totalorder %s13, 8
      %p129 = por %p127, %p128
      %p130 = scmp.ne.s32.totalorder %s122, %s125
      %p131 = scmp.eq.s32.totalorder %s13, 0
      %p132 = por %p130, %p131
      %p133 = scmp.ne.s32.totalorder %s122, %s125
      %p134 = scmp.eq.s32.totalorder %s18, 8
      %p135 = por %p133, %p134
      %p136 = scmp.ne.s32.totalorder %s125, %s126
      %p137 = scmp.eq.s32.totalorder %s18, 0
      %p138 = por %p136, %p137
      %p139 = scmp.ne.s32.totalorder %s125, %s126
      %p140 = scmp.eq.s32.totalorder %s19, 8
      %p141 = por %p139, %p140
      %p143 = scmp.ne.s32.totalorder %s126, %s142
      %p144 = scmp.eq.s32.totalorder %s19, 0
      %p145 = por %p143, %p144
      %s146 = ssub.s32 %s20, %s39
      %s147 = ssub.s32 %s22, %s31
      %s148 = sor.u32 %s146, %s147
      %p149 = scmp.eq.s32.totalorder %s148, 0
      %s151 = sadd.s32 %s150, 1
      %s152 = scalar_select %p149, %s150, %s151
      %p155 = pneg %p149
      %p156 = scmp.eq.s32.totalorder %s13, 8
      %p157 = por %p155, %p156
      %p158 = scmp.ne.s32.totalorder %s150, %s153
      %p159 = scmp.eq.s32.totalorder %s13, 0
      %p160 = por %p158, %p159
      %p161 = scmp.ne.s32.totalorder %s150, %s153
      %p162 = scmp.eq.s32.totalorder %s18, 8
      %p163 = por %p161, %p162
      %p164 = scmp.ne.s32.totalorder %s153, %s154
      %p165 = scmp.eq.s32.totalorder %s18, 0
      %p166 = por %p164, %p165
      %p167 = scmp.ne.s32.totalorder %s153, %s154
      %p168 = scmp.eq.s32.totalorder %s19, 8
      %p169 = por %p167, %p168
      %p171 = scmp.ne.s32.totalorder %s154, %s170
      %p172 = scmp.eq.s32.totalorder %s19, 0
      %p173 = por %p171, %p172
      %s174 = ssub.s32 %s20, %s39
      %s175 = ssub.s32 %s22, %s31
      %s176 = sor.u32 %s174, %s175
      %p177 = scmp.eq.s32.totalorder %s176, 0
      %s179 = sadd.s32 %s178, 1
      %s180 = scalar_select %p177, %s178, %s179
      %p183 = pneg %p177
      %p184 = scmp.eq.s32.totalorder %s13, 8
      %p185 = por %p183, %p184
      %p186 = scmp.ne.s32.totalorder %s178, %s181
      %p187 = scmp.eq.s32.totalorder %s13, 0
      %p188 = por %p186, %p187
      %p189 = scmp.ne.s32.totalorder %s178, %s181
      %p190 = scmp.eq.s32.totalorder %s18, 8
      %p191 = por %p189, %p190
      %p192 = scmp.ne.s32.totalorder %s181, %s182
      %p193 = scmp.eq.s32.totalorder %s18, 0
      %p194 = por %p192, %p193
      %p195 = scmp.ne.s32.totalorder %s181, %s182
      %p196 = scmp.eq.s32.totalorder %s19, 8
      %p197 = por %p195, %p196
      %p199 = scmp.ne.s32.totalorder %s182, %s198
      %p200 = scmp.eq.s32.totalorder %s19, 0
      %p201 = por %p199, %p200
      %s202 = ssub.s32 %s20, %s39
      %s203 = ssub.s32 %s21, %s35
      %s204 = sor.u32 %s202, %s203
      %p205 = scmp.eq.s32.totalorder %s204, 0
      %s207 = sadd.s32 %s206, 1
      %s208 = scalar_select %p205, %s206, %s207
      %p211 = pneg %p205
      %p212 = scmp.eq.s32.totalorder %s13, 8
      %p213 = por %p211, %p212
      %p214 = scmp.ne.s32.totalorder %s206, %s209
      %p215 = scmp.eq.s32.totalorder %s13, 0
      %p216 = por %p214, %p215
      %p217 = scmp.ne.s32.totalorder %s206, %s209
      %p218 = scmp.eq.s32.totalorder %s18, 8
      %p219 = por %p217, %p218
      %p220 = scmp.ne.s32.totalorder %s209, %s210
      %p221 = scmp.eq.s32.totalorder %s18, 0
      %p222 = por %p220, %p221
      %p223 = scmp.ne.s32.totalorder %s209, %s210
      %p224 = scmp.eq.s32.totalorder %s19, 8
      %p225 = por %p223, %p224
      %p227 = scmp.ne.s32.totalorder %s210, %s226
      %p228 = scmp.eq.s32.totalorder %s19, 0
      %p229 = por %p227, %p228
      %s230 = ssub.s32 %s20, %s39
      %s231 = ssub.s32 %s21, %s35
      %s232 = sor.u32 %s230, %s231
      %p233 = scmp.eq.s32.totalorder %s232, 0
      %s235 = sadd.s32 %s234, 1
      %s236 = scalar_select %p233, %s234, %s235
      %p239 = pneg %p233
      %p240 = scmp.eq.s32.totalorder %s13, 8
      %p241 = por %p239, %p240
      %p242 = scmp.ne.s32.totalorder %s234, %s237
      %p243 = scmp.eq.s32.totalorder %s13, 0
      %p244 = por %p242, %p243
      %p245 = scmp.ne.s32.totalorder %s234, %s237
      %p246 = scmp.eq.s32.totalorder %s18, 8
      %p247 = por %p245, %p246
      %p248 = scmp.ne.s32.totalorder %s237, %s238
      %p249 = scmp.eq.s32.totalorder %s18, 0
      %p250 = por %p248, %p249
      %p251 = scmp.ne.s32.totalorder %s237, %s238
      %p252 = scmp.eq.s32.totalorder %s19, 8
      %p253 = por %p251, %p252
      %p255 = scmp.ne.s32.totalorder %s238, %s254
      %p256 = scmp.eq.s32.totalorder %s19, 0
      %p257 = por %p255, %p256
      %p258 = scmp.le.s32.totalorder 1, %s13
      %p259 = scmp.lt.s32.totalorder %s13, 10
      %p260 = pnand %p258, %p259
      %p261 = pneg %p260
      // Predicated region
      $region9: #{run.1} parent=5 // pred_check
        _
      $region10: #{run.1} parent=5 // pred_check_branch
        %263 = sbr.rel (%p260) target = $region12
      $region11: #{run.1} parent=5 // pred_region
        %s264 = ssub.s32 %s13, 1
        // Predicated region
        $region13: #{run.1} parent=11 // pred_check
          %p265 = pneg %p58
        $region14: #{run.1} parent=11 // pred_check_branch
          %267 = sbr.rel (%p265) target = $region16
        $region15: #{run.1} parent=11 // pred_region
          %s268 = smul.u32 8, %s24
          %p269 = scmp.lt.s32.totalorder %s268, 7
          %s270 = scalar_select %p269, %s268, 7
          %s271 = smul.addr %s270, 4
          %s272 = scalar_lea.vmem %s0, %s271
          %s273 = smul.u32 8, %s24
        $region16: #{run.1} parent=11 // pred_fallthru
          _
      $region12: #{run.1} parent=5 // pred_fallthru
        _
      %p274 = scmp.lt.s32.totalorder %s13, 9
      // Predicated region
      $region17: #{run.1} parent=5 // pred_check
        %p275 = pneg %p274
      $region18: #{run.1} parent=5 // pred_check_branch
        %277 = sbr.rel (%p275) target = $region20
      $region19: #{run.1} parent=5 // pred_region
        // Predicated region
        $region21: #{run.1} parent=19 // pred_check
          %p278 = pneg %p80
        $region22: #{run.1} parent=19 // pred_check_branch
          %280 = sbr.rel (%p278) target = $region24
        $region23: #{run.1} parent=19 // pred_region
          %s281 = sand.u32 %s70, 1
          %s282 = sand.u32 %s70, 1
          %s283 = smul.addr %s282, 64
          %s284 = scalar_lea.vmem [#allocation4], %s283
          %s285 = smul.u32 8, %s21
          %s286 = smul.addr %s285, 3
          %s287 = sadd.s32 %s22, %s286
          %s288 = smul.addr %s287, 8
          %s289 = scalar_lea.vmem %s1, %s288
          // Predicated region
          $region25: #{run.1} parent=23 // pred_check
            _
          $region26: #{run.1} parent=23 // pred_check_branch
            %291 = sbr.rel (0) target = $region28
          $region27: #{run.1} parent=23 // pred_region
            // Predicated region
            $region29: #{run.1} parent=27 // pred_check
              _
            $region30: #{run.1} parent=27 // pred_check_branch
              %293 = sbr.rel (0) target = $region32
            $region31: #{run.1} parent=27 // pred_region
              // Predicated region
              $region44: #{run.1} parent=31 // pred_check
                _
              $region45: #{run.1} parent=31 // pred_check_branch
                %323 = sbr.rel (0) target = $region47
              $region46: #{run.1} parent=31 // pred_region
                loop: start=0, step=1, limit=1
                $region48: #{run.1} parent=46 // loop_pre_header
                  _
                $region49: #{run.1} parent=46 // loop_header
                  %s325 = sphi 0, %s329
                  %p326 = scmp.ge.s32.totalorder %s325, 1
                  %s330 = sphi %s289, %s289
                  %s331 = sphi %s284, %s284
                $region50: #{run.1} parent=46 // loop_header_branch
                  %328 = sbr.rel (%p326) target = $region54
                $region51: #{run.1} parent=46 // loop_body
                  %v332 = vld [vmem:[%s330] sm:$0xff]
                  %333 = vst [vmem:[%s331] sm:$0xff] %v332
                  %v334 = vld [vmem:[%s330 + $0x18] sm:$0xff]
                  %335 = vst [vmem:[%s331 + $0x8] sm:$0xff] %v334
                  %v336 = vld [vmem:[%s330 + $0x30] sm:$0xff]
                  %337 = vst [vmem:[%s331 + $0x10] sm:$0xff] %v336
                  %v338 = vld [vmem:[%s330 + $0x48] sm:$0xff]
                  %339 = vst [vmem:[%s331 + $0x18] sm:$0xff] %v338
                  %v340 = vld [vmem:[%s330 + $0x60] sm:$0xff]
                  %341 = vst [vmem:[%s331 + $0x20] sm:$0xff] %v340
                  %v342 = vld [vmem:[%s330 + $0x78] sm:$0xff]
                  %343 = vst [vmem:[%s331 + $0x28] sm:$0xff] %v342
                  %v344 = vld [vmem:[%s330 + $0x90] sm:$0xff]
                  %345 = vst [vmem:[%s331 + $0x30] sm:$0xff] %v344
                  %v346 = vld [vmem:[%s330 + $0xa8] sm:$0xff]
                  %347 = vst [vmem:[%s331 + $0x38] sm:$0xff] %v346
                $region52: #{run.1} parent=46 // loop_footer
                  %s329 = sadd.s32 1, %s325
                $region53: #{run.1} parent=46 // loop_footer_branch
                  %324 = sbr.rel target = $region49
                $region54: #{run.1} parent=46 // loop_exit
                  _
              $region47: #{run.1} parent=31 // pred_fallthru
                _
              // Predicated region
              $region55: #{run.1} parent=31 // pred_check
                _
              $region56: #{run.1} parent=31 // pred_check_branch
                %349 = sbr.rel target = $region58
              $region57: #{run.1} parent=31 // pred_region
                _
              $region58: #{run.1} parent=31 // pred_fallthru
                _
            $region32: #{run.1} parent=27 // pred_fallthru
              _
            // Predicated region
            $region33: #{run.1} parent=27 // pred_check
              _
            $region34: #{run.1} parent=27 // pred_check_branch
              %295 = sbr.rel target = $region36
            $region35: #{run.1} parent=27 // pred_region
              %s297 = ssub.s32 256, 1
              loop: start=0, step=1, limit=1
              $region37: #{run.1} parent=35 // loop_pre_header
                _
              $region38: #{run.1} parent=35 // loop_header
                %s299 = sphi 0, %s303
                %p300 = scmp.ge.s32.totalorder %s299, 1
                %s304 = sphi %s289, %s289
                %s305 = sphi %s284, %s284
              $region39: #{run.1} parent=35 // loop_header_branch
                %302 = sbr.rel (%p300) target = $region43
              $region40: #{run.1} parent=35 // loop_body
                %v306 = vld [vmem:[%s304] sm:%s297]
                %307 = vst [vmem:[%s305] sm:%s297] %v306
                %v308 = vld [vmem:[%s304 + $0x18] sm:%s297]
                %309 = vst [vmem:[%s305 + $0x8] sm:%s297] %v308
                %v310 = vld [vmem:[%s304 + $0x30] sm:%s297]
                %311 = vst [vmem:[%s305 + $0x10] sm:%s297] %v310
                %v312 = vld [vmem:[%s304 + $0x48] sm:%s297]
                %313 = vst [vmem:[%s305 + $0x18] sm:%s297] %v312
                %v314 = vld [vmem:[%s304 + $0x60] sm:%s297]
                %315 = vst [vmem:[%s305 + $0x20] sm:%s297] %v314
                %v316 = vld [vmem:[%s304 + $0x78] sm:%s297]
                %317 = vst [vmem:[%s305 + $0x28] sm:%s297] %v316
                %v318 = vld [vmem:[%s304 + $0x90] sm:%s297]
                %319 = vst [vmem:[%s305 + $0x30] sm:%s297] %v318
                %v320 = vld [vmem:[%s304 + $0xa8] sm:%s297]
                %321 = vst [vmem:[%s305 + $0x38] sm:%s297] %v320
              $region41: #{run.1} parent=35 // loop_footer
                %s303 = sadd.s32 1, %s299
              $region42: #{run.1} parent=35 // loop_footer_branch
                %298 = sbr.rel target = $region38
              $region43: #{run.1} parent=35 // loop_exit
                _
            $region36: #{run.1} parent=27 // pred_fallthru
              _
          $region28: #{run.1} parent=23 // pred_fallthru
            _
          %350 = vnop
        $region24: #{run.1} parent=19 // pred_fallthru
          _
        // Predicated region
        $region59: #{run.1} parent=19 // pred_check
          %p351 = pneg %p106
        $region60: #{run.1} parent=19 // pred_check_branch
          %353 = sbr.rel (%p351) target = $region62
        $region61: #{run.1} parent=19 // pred_region
          %p354 = scmp.lt.s32.totalorder %s20, 2
          %s355 = scalar_select %p354, %s20, 2
          %s356 = smul.addr %s355, 16
          %s357 = smul.addr %s356, 4
          %s358 = scalar_lea.vmem %s2, %s357
        $region62: #{run.1} parent=19 // pred_fallthru
          _
        // Predicated region
        $region63: #{run.1} parent=19 // pred_check
          %p359 = pneg %p132
        $region64: #{run.1} parent=19 // pred_check_branch
          %361 = sbr.rel (%p359) target = $region66
        $region65: #{run.1} parent=19 // pred_region
          %p362 = scmp.lt.s32.totalorder %s20, 2
          %s363 = scalar_select %p362, %s20, 2
          %s364 = scalar_lea.vmem %s3, %s363
        $region66: #{run.1} parent=19 // pred_fallthru
          _
        // Predicated region
        $region67: #{run.1} parent=19 // pred_check
          %p365 = pneg %p160
        $region68: #{run.1} parent=19 // pred_check_branch
          %367 = sbr.rel (%p365) target = $region70
        $region69: #{run.1} parent=19 // pred_region
          %s368 = sand.u32 %s150, 1
          %s369 = sand.u32 %s150, 1
          %s370 = smul.addr %s369, 64
          %s371 = scalar_lea.vmem [#allocation5], %s370
          %s372 = smul.addr %s20, 48
          %s373 = sadd.s32 %s22, %s372
          %s374 = smul.addr %s373, 4
          %s375 = scalar_lea.vmem %s4, %s374
          // Predicated region
          $region71: #{run.1} parent=69 // pred_check
            _
          $region72: #{run.1} parent=69 // pred_check_branch
            %377 = sbr.rel (0) target = $region74
          $region73: #{run.1} parent=69 // pred_region
            // Predicated region
            $region75: #{run.1} parent=73 // pred_check
              _
            $region76: #{run.1} parent=73 // pred_check_branch
              %379 = sbr.rel target = $region78
            $region77: #{run.1} parent=73 // pred_region
              // Predicated region
              $region90: #{run.1} parent=77 // pred_check
                _
              $region91: #{run.1} parent=77 // pred_check_branch
                %425 = sbr.rel (0) target = $region93
              $region92: #{run.1} parent=77 // pred_region
                loop: start=0, step=1, limit=1
                $region94: #{run.1} parent=92 // loop_pre_header
                  _
                $region95: #{run.1} parent=92 // loop_header
                  %s427 = sphi 0, %s431
                  %p428 = scmp.ge.s32.totalorder %s427, 1
                  %s432 = sphi %s375, %s375
                  %s433 = sphi %s371, %s371
                $region96: #{run.1} parent=92 // loop_header_branch
                  %430 = sbr.rel (%p428) target = $region100
                $region97: #{run.1} parent=92 // loop_body
                  _
                $region98: #{run.1} parent=92 // loop_footer
                  %s431 = sadd.s32 1, %s427
                $region99: #{run.1} parent=92 // loop_footer_branch
                  %426 = sbr.rel target = $region95
                $region100: #{run.1} parent=92 // loop_exit
                  _
                %s435 = ssub.s32 16, 1
                loop: start=0, step=1, limit=1
                $region101: #{run.1} parent=92 // loop_pre_header
                  _
                $region102: #{run.1} parent=92 // loop_header
                  %s437 = sphi 0, %s441
                  %p438 = scmp.ge.s32.totalorder %s437, 1
                  %s442 = sphi %s375, %s375
                  %s443 = sphi %s371, %s371
                $region103: #{run.1} parent=92 // loop_header_branch
                  %440 = sbr.rel (%p438) target = $region107
                $region104: #{run.1} parent=92 // loop_body
                  %v444 = vld [vmem:[%s442] sm:%s435]
                  %445 = vst [vmem:[%s443] sm:%s435] %v444
                  %v446 = vld [vmem:[%s442 + $0xc] sm:%s435]
                  %447 = vst [vmem:[%s443 + $0x4] sm:%s435] %v446
                  %v448 = vld [vmem:[%s442 + $0x18] sm:%s435]
                  %449 = vst [vmem:[%s443 + $0x8] sm:%s435] %v448
                  %v450 = vld [vmem:[%s442 + $0x24] sm:%s435]
                  %451 = vst [vmem:[%s443 + $0xc] sm:%s435] %v450
                  %v452 = vld [vmem:[%s442 + $0x30] sm:%s435]
                  %453 = vst [vmem:[%s443 + $0x10] sm:%s435] %v452
                  %v454 = vld [vmem:[%s442 + $0x3c] sm:%s435]
                  %455 = vst [vmem:[%s443 + $0x14] sm:%s435] %v454
                  %v456 = vld [vmem:[%s442 + $0x48] sm:%s435]
                  %457 = vst [vmem:[%s443 + $0x18] sm:%s435] %v456
                  %v458 = vld [vmem:[%s442 + $0x54] sm:%s435]
                  %459 = vst [vmem:[%s443 + $0x1c] sm:%s435] %v458
                  %v460 = vld [vmem:[%s442 + $0x60] sm:%s435]
                  %461 = vst [vmem:[%s443 + $0x20] sm:%s435] %v460
                  %v462 = vld [vmem:[%s442 + $0x6c] sm:%s435]
                  %463 = vst [vmem:[%s443 + $0x24] sm:%s435] %v462
                  %v464 = vld [vmem:[%s442 + $0x78] sm:%s435]
                  %465 = vst [vmem:[%s443 + $0x28] sm:%s435] %v464
                  %v466 = vld [vmem:[%s442 + $0x84] sm:%s435]
                  %467 = vst [vmem:[%s443 + $0x2c] sm:%s435] %v466
                  %v468 = vld [vmem:[%s442 + $0x90] sm:%s435]
                  %469 = vst [vmem:[%s443 + $0x30] sm:%s435] %v468
                  %v470 = vld [vmem:[%s442 + $0x9c] sm:%s435]
                  %471 = vst [vmem:[%s443 + $0x34] sm:%s435] %v470
                  %v472 = vld [vmem:[%s442 + $0xa8] sm:%s435]
                  %473 = vst [vmem:[%s443 + $0x38] sm:%s435] %v472
                  %v474 = vld [vmem:[%s442 + $0xb4] sm:%s435]
                  %475 = vst [vmem:[%s443 + $0x3c] sm:%s435] %v474
                $region105: #{run.1} parent=92 // loop_footer
                  %s441 = sadd.s32 1, %s437
                $region106: #{run.1} parent=92 // loop_footer_branch
                  %436 = sbr.rel target = $region102
                $region107: #{run.1} parent=92 // loop_exit
                  _
              $region93: #{run.1} parent=77 // pred_fallthru
                _
            $region78: #{run.1} parent=73 // pred_fallthru
              _
            // Predicated region
            $region79: #{run.1} parent=73 // pred_check
              _
            $region80: #{run.1} parent=73 // pred_check_branch
              %381 = sbr.rel (0) target = $region82
            $region81: #{run.1} parent=73 // pred_region
              %s383 = ssub.s32 16, 1
              loop: start=0, step=1, limit=1
              $region83: #{run.1} parent=81 // loop_pre_header
                _
              $region84: #{run.1} parent=81 // loop_header
                %s385 = sphi 0, %s389
                %p386 = scmp.ge.s32.totalorder %s385, 1
                %s390 = sphi %s375, %s375
                %s391 = sphi %s371, %s371
              $region85: #{run.1} parent=81 // loop_header_branch
                %388 = sbr.rel (%p386) target = $region89
              $region86: #{run.1} parent=81 // loop_body
                %v392 = vld [vmem:[%s390] sm:%s383]
                %393 = vst [vmem:[%s391] sm:%s383] %v392
                %v394 = vld [vmem:[%s390 + $0xc] sm:%s383]
                %395 = vst [vmem:[%s391 + $0x4] sm:%s383] %v394
                %v396 = vld [vmem:[%s390 + $0x18] sm:%s383]
                %397 = vst [vmem:[%s391 + $0x8] sm:%s383] %v396
                %v398 = vld [vmem:[%s390 + $0x24] sm:%s383]
                %399 = vst [vmem:[%s391 + $0xc] sm:%s383] %v398
                %v400 = vld [vmem:[%s390 + $0x30] sm:%s383]
                %401 = vst [vmem:[%s391 + $0x10] sm:%s383] %v400
                %v402 = vld [vmem:[%s390 + $0x3c] sm:%s383]
                %403 = vst [vmem:[%s391 + $0x14] sm:%s383] %v402
                %v404 = vld [vmem:[%s390 + $0x48] sm:%s383]
                %405 = vst [vmem:[%s391 + $0x18] sm:%s383] %v404
                %v406 = vld [vmem:[%s390 + $0x54] sm:%s383]
                %407 = vst [vmem:[%s391 + $0x1c] sm:%s383] %v406
                %v408 = vld [vmem:[%s390 + $0x60] sm:%s383]
                %409 = vst [vmem:[%s391 + $0x20] sm:%s383] %v408
                %v410 = vld [vmem:[%s390 + $0x6c] sm:%s383]
                %411 = vst [vmem:[%s391 + $0x24] sm:%s383] %v410
                %v412 = vld [vmem:[%s390 + $0x78] sm:%s383]
                %413 = vst [vmem:[%s391 + $0x28] sm:%s383] %v412
                %v414 = vld [vmem:[%s390 + $0x84] sm:%s383]
                %415 = vst [vmem:[%s391 + $0x2c] sm:%s383] %v414
                %v416 = vld [vmem:[%s390 + $0x90] sm:%s383]
                %417 = vst [vmem:[%s391 + $0x30] sm:%s383] %v416
                %v418 = vld [vmem:[%s390 + $0x9c] sm:%s383]
                %419 = vst [vmem:[%s391 + $0x34] sm:%s383] %v418
                %v420 = vld [vmem:[%s390 + $0xa8] sm:%s383]
                %421 = vst [vmem:[%s391 + $0x38] sm:%s383] %v420
                %v422 = vld [vmem:[%s390 + $0xb4] sm:%s383]
                %423 = vst [vmem:[%s391 + $0x3c] sm:%s383] %v422
              $region87: #{run.1} parent=81 // loop_footer
                %s389 = sadd.s32 1, %s385
              $region88: #{run.1} parent=81 // loop_footer_branch
                %384 = sbr.rel target = $region84
              $region89: #{run.1} parent=81 // loop_exit
                _
            $region82: #{run.1} parent=73 // pred_fallthru
              _
          $region74: #{run.1} parent=69 // pred_fallthru
            _
          %476 = vnop
        $region70: #{run.1} parent=19 // pred_fallthru
          _
        // Predicated region
        $region108: #{run.1} parent=19 // pred_check
          %p477 = pneg %p188
        $region109: #{run.1} parent=19 // pred_check_branch
          %479 = sbr.rel (%p477) target = $region111
        $region110: #{run.1} parent=19 // pred_region
          %p480 = scmp.lt.s32.totalorder %s20, 2
          %s481 = scalar_select %p480, %s20, 2
          %p482 = scmp.lt.s32.totalorder %s22, 2
          %s483 = scalar_select %p482, %s22, 2
          %s484 = smul.addr %s481, 3
          %s485 = sadd.s32 %s483, %s484
          %s486 = scalar_lea.vmem %s5, %s485
        $region111: #{run.1} parent=19 // pred_fallthru
          _
        // Predicated region
        $region112: #{run.1} parent=19 // pred_check
          %p487 = pneg %p216
        $region113: #{run.1} parent=19 // pred_check_branch
          %489 = sbr.rel (%p487) target = $region115
        $region114: #{run.1} parent=19 // pred_region
          %s490 = smul.u32 8, %s21
          %p491 = scmp.lt.s32.totalorder %s20, 2
          %s492 = scalar_select %p491, %s20, 2
          %p493 = scmp.lt.s32.totalorder %s490, 7
          %s494 = scalar_select %p493, %s490, 7
          %s495 = smul.addr %s492, 8
          %s496 = sadd.s32 %s494, %s495
          %s497 = smul.addr %s496, 8
          %s498 = scalar_lea.vmem %s6, %s497
          %s499 = smul.u32 8, %s21
        $region115: #{run.1} parent=19 // pred_fallthru
          _
      $region20: #{run.1} parent=5 // pred_fallthru
        _
      %p500 = scmp.le.s32.totalorder 1, %s13
      %p501 = scmp.lt.s32.totalorder %s13, 10
      %p502 = pnand %p500, %p501
      %p503 = pneg %p502
      // Predicated region
      $region116: #{run.1} parent=5 // pred_check
        _
      $region117: #{run.1} parent=5 // pred_check_branch
        %505 = sbr.rel (%p502) target = $region119
      $region118: #{run.1} parent=5 // pred_region
        %s506 = ssub.s32 %s13, 1
        %s507 = sand.u32 %s73, 1
        %s508 = sand.u32 %s73, 1
        %s509 = smul.addr %s508, 64
        %s510 = scalar_lea.vmem [#allocation4], %s509
        // Predicated region
        $region120: #{run.1} parent=118 // pred_check
          %p511 = pneg %p86
        $region121: #{run.1} parent=118 // pred_check_branch
          %513 = sbr.rel (%p511) target = $region123
        $region122: #{run.1} parent=118 // pred_region
          _
        $region123: #{run.1} parent=118 // pred_fallthru
          _
        %s514 = sand.u32 %s153, 1
        %s515 = sand.u32 %s153, 1
        %s516 = smul.addr %s515, 64
        %s517 = scalar_lea.vmem [#allocation5], %s516
        // Predicated region
        $region124: #{run.1} parent=118 // pred_check
          %p518 = pneg %p166
        $region125: #{run.1} parent=118 // pred_check_branch
          %520 = sbr.rel (%p518) target = $region127
        $region126: #{run.1} parent=118 // pred_region
          _
        $region127: #{run.1} parent=118 // pred_fallthru
          _
        %s521 = smul.u32 8, %s24
        %p522 = scmp.lt.s32.totalorder %s521, 7
        %s523 = scalar_select %p522, %s521, 7
        %s524 = smul.addr %s523, 4
        %s525 = scalar_lea.vmem %s0, %s524
        %p526 = pneg %p58
        %p527 = pneg %p55
        %s528 = sand.u32 %s73, 1
        %s529 = sand.u32 %s73, 1
        %s530 = smul.addr %s529, 64
        %s531 = scalar_lea.vmem [#allocation4], %s530
        %p532 = pneg %p86
        %p533 = pneg %p83
        %p534 = scmp.lt.s32.totalorder %s23, 2
        %s535 = scalar_select %p534, %s23, 2
        %s536 = smul.addr %s535, 16
        %s537 = smul.addr %s536, 4
        %s538 = scalar_lea.vmem %s2, %s537
        %p539 = pneg %p112
        %p540 = pneg %p109
        %p541 = scmp.lt.s32.totalorder %s23, 2
        %s542 = scalar_select %p541, %s23, 2
        %s543 = scalar_lea.vmem %s3, %s542
        %p544 = pneg %p138
        %p545 = pneg %p135
        %s546 = sand.u32 %s153, 1
        %s547 = sand.u32 %s153, 1
        %s548 = smul.addr %s547, 64
        %s549 = scalar_lea.vmem [#allocation5], %s548
        %p550 = pneg %p166
        %p551 = pneg %p163
        %p552 = scmp.lt.s32.totalorder %s23, 2
        %s553 = scalar_select %p552, %s23, 2
        %p554 = scmp.lt.s32.totalorder %s25, 2
        %s555 = scalar_select %p554, %s25, 2
        %s556 = smul.addr %s553, 3
        %s557 = sadd.s32 %s555, %s556
        %s558 = scalar_lea.vmem %s5, %s557
        %p559 = pneg %p194
        %p560 = pneg %p191
        %s561 = smul.u32 8, %s24
        %p562 = scmp.lt.s32.totalorder %s23, 2
        %s563 = scalar_select %p562, %s23, 2
        %p564 = scmp.lt.s32.totalorder %s561, 7
        %s565 = scalar_select %p564, %s561, 7
        %s566 = smul.addr %s563, 8
        %s567 = sadd.s32 %s565, %s566
        %s568 = smul.addr %s567, 8
        %s569 = scalar_lea.vmem %s6, %s568
        %p570 = pneg %p222
        %p571 = pneg %p219
        %p572 = pneg %p250
        %p573 = pneg %p247
        %p574 = scmp.lt.s32.totalorder %s23, 2
        %s575 = scalar_select %p574, %s23, 2
        %p576 = scmp.lt.s32.totalorder %s24, 0
        %s577 = scalar_select %p576, %s24, 0
        %s578 = sadd.s32 %s577, %s575
        %s579 = smul.addr %s578, 8
        %s580 = scalar_lea.vmem %s7, %s579
        %s581 = smul.u32 8, %s24
        %p582 = scmp.lt.s32.totalorder %s581, 7
        %s583 = scalar_select %p582, %s581, 7
        %s584 = smul.addr %s583, 4
        %s585 = scalar_lea.vmem %s0, %s584
        %s586 = smul.u32 8, %s24
        %s587 = smul.u32 8, %s24
        %p588 = scmp.lt.s32.totalorder %s23, 2
        %s589 = scalar_select %p588, %s23, 2
        %s590 = smul.addr %s589, 16
        %s591 = smul.addr %s590, 4
        %s592 = scalar_lea.vmem %s2, %s591
        %p593 = scmp.lt.s32.totalorder %s23, 2
        %s594 = scalar_select %p593, %s23, 2
        %s595 = scalar_lea.vmem %s3, %s594
        %p596 = scmp.lt.s32.totalorder %s23, 2
        %s597 = scalar_select %p596, %s23, 2
        %p598 = scmp.lt.s32.totalorder %s25, 2
        %s599 = scalar_select %p598, %s25, 2
        %s600 = smul.addr %s597, 3
        %s601 = sadd.s32 %s599, %s600
        %s602 = scalar_lea.vmem %s5, %s601
        %s603 = smul.u32 8, %s24
        %p604 = scmp.lt.s32.totalorder %s23, 2
        %s605 = scalar_select %p604, %s23, 2
        %p606 = scmp.lt.s32.totalorder %s603, 7
        %s607 = scalar_select %p606, %s603, 7
        %s608 = smul.addr %s605, 8
        %s609 = sadd.s32 %s607, %s608
        %s610 = smul.addr %s609, 8
        %s611 = scalar_lea.vmem %s6, %s610
        %s612 = smul.u32 8, %s24
        %p613 = scmp.lt.s32.totalorder %s23, 2
        %s614 = scalar_select %p613, %s23, 2
        %p615 = scmp.lt.s32.totalorder %s24, 0
        %s616 = scalar_select %p615, %s24, 0
        %s617 = sadd.s32 %s616, %s614
        %s618 = smul.addr %s617, 8
        %s619 = scalar_lea.vmem %s7, %s618
        %p621 = scmp.eq.s32.totalorder %s25, 0
        // Predicated region
        $region128: #{run.1} parent=118 // pred_check
          %p622 = pneg %p621
        $region129: #{run.1} parent=118 // pred_check_branch
          %624 = sbr.rel (%p622) target = $region131
        $region130: #{run.1} parent=118 // pred_region
          %v625 = vld [vmem:[%s585] sm:$0xf]
          %v626 = vld [vmem:[%s585 + $0x4] sm:$0xf]
          %v627 = vld [vmem:[%s585 + $0x8] sm:$0xf]
          %v628 = vld [vmem:[%s585 + $0xc] sm:$0xf]
          %v629 = vld [vmem:[%s585 + $0x10] sm:$0xf]
          %v630 = vld [vmem:[%s585 + $0x14] sm:$0xf]
          %v631 = vld [vmem:[%s585 + $0x18] sm:$0xf]
          %v632 = vld [vmem:[%s585 + $0x1c] sm:$0xf]
          %v633 = vld [vmem:[%s592] sm:$0xf]
          %v634 = vld [vmem:[%s592 + $0x4] sm:$0xf]
          %v635 = vld [vmem:[%s592 + $0x8] sm:$0xf]
          %v636 = vld [vmem:[%s592 + $0xc] sm:$0xf]
          %v637 = vld [vmem:[%s592 + $0x10] sm:$0xf]
          %v638 = vld [vmem:[%s592 + $0x14] sm:$0xf]
          %v639 = vld [vmem:[%s592 + $0x18] sm:$0xf]
          %v640 = vld [vmem:[%s592 + $0x1c] sm:$0xf]
          %v641 = vld [vmem:[%s592 + $0x20] sm:$0xf]
          %v642 = vld [vmem:[%s592 + $0x24] sm:$0xf]
          %v643 = vld [vmem:[%s592 + $0x28] sm:$0xf]
          %v644 = vld [vmem:[%s592 + $0x2c] sm:$0xf]
          %v645 = vld [vmem:[%s592 + $0x30] sm:$0xf]
          %v646 = vld [vmem:[%s592 + $0x34] sm:$0xf]
          %v647 = vld [vmem:[%s592 + $0x38] sm:$0xf]
          %v648 = vld [vmem:[%s592 + $0x3c] sm:$0xf]
          %v649 = vld [vmem:[%s595] sm:$0x1]
          %v651 = vlaneseq
          %v652 = vshrl.u32 %v651, 7
          %v653 = vsub.s32 0, %v652
          %v654 = vrot.slane %v649, %v653
          %v664 = vunpack.c.l.b16 %v625
          %v665 = vunpack.c.l.b16 %v626
          %v666 = vunpack.c.l.b16 %v627
          %v667 = vunpack.c.l.b16 %v628
          %v668 = vunpack.c.l.b16 %v629
          %v669 = vunpack.c.l.b16 %v630
          %v670 = vunpack.c.l.b16 %v631
          %v671 = vunpack.c.l.b16 %v632
          %v672 = vpack.c.b16 %v665, %v664
          %v673 = vpack.c.b16 %v667, %v666
          %v674 = vpack.c.b16 %v669, %v668
          %v675 = vpack.c.b16 %v671, %v670
          %v696 = vunpack.c.l.b16 %v633
          %v697 = vunpack.c.l.b16 %v634
          %v698 = vunpack.c.l.b16 %v635
          %v699 = vunpack.c.l.b16 %v636
          %v700 = vunpack.c.l.b16 %v637
          %v701 = vunpack.c.l.b16 %v638
          %v702 = vunpack.c.l.b16 %v639
          %v703 = vunpack.c.l.b16 %v640
          %v704 = vunpack.c.l.b16 %v641
          %v705 = vunpack.c.l.b16 %v642
          %v706 = vunpack.c.l.b16 %v643
          %v707 = vunpack.c.l.b16 %v644
          %v708 = vunpack.c.l.b16 %v645
          %v709 = vunpack.c.l.b16 %v646
          %v710 = vunpack.c.l.b16 %v647
          %v711 = vunpack.c.l.b16 %v648
          %v712 = vpack.c.b16 %v697, %v696
          %v713 = vpack.c.b16 %v699, %v698
          %v714 = vpack.c.b16 %v701, %v700
          %v715 = vpack.c.b16 %v703, %v702
          %v716 = vpack.c.b16 %v705, %v704
          %v717 = vpack.c.b16 %v707, %v706
          %v718 = vpack.c.b16 %v709, %v708
          %v719 = vpack.c.b16 %v711, %v710
          %728 = vmatprep.subr.bf16.mxu0 0
          %729 = vmatpush1.bf16.msra.mxu0 %v719
          %730 = vmatprep.subr.bf16.mxu0 0
          %731 = vmatpush1.bf16.msra.mxu0 %v718
          %732 = vmatprep.subr.bf16.mxu0 0
          %733 = vmatpush1.bf16.msra.mxu0 %v717
          %734 = vmatprep.subr.bf16.mxu0 0
          %735 = vmatpush1.bf16.msra.mxu0 %v716
          %736 = vmatprep.subr.bf16.mxu0 0
          %737 = vmatpush1.bf16.msra.mxu0 %v715
          %738 = vmatprep.subr.bf16.mxu0 0
          %739 = vmatpush1.bf16.msra.mxu0 %v714
          %740 = vmatprep.subr.bf16.mxu0 0
          %741 = vmatpush1.bf16.msra.mxu0 %v713
          %742 = vmatprep.subr.bf16.mxu0 0
          %743 = vmatpush1.bf16.msra.mxu0 %v712
          %744 = vmatprep.subr.bf16.mxu0 0
          %745 = vmatpush2.bf16.msra.mxu0 0
          %746 = vmatprep.subr.bf16.mxu0 0
          %747 = vmatpush2.bf16.msra.mxu0 0
          %748 = vmatprep.subr.bf16.mxu0 0
          %749 = vmatpush2.bf16.msra.mxu0 0
          %750 = vmatprep.subr.bf16.mxu0 0
          %751 = vmatpush2.bf16.msra.mxu0 0
          %752 = vmatprep.subr.bf16.mxu0 0
          %753 = vmatpush2.bf16.msra.mxu0 0
          %754 = vmatprep.subr.bf16.mxu0 0
          %755 = vmatpush2.bf16.msra.mxu0 0
          %756 = vmatprep.subr.bf16.mxu0 0
          %757 = vmatpush2.bf16.msra.mxu0 0
          %758 = vmatprep.subr.bf16.mxu0 0
          %759 = vmatpush2.bf16.msra.mxu0 0
          %760 = vmatprep.mubr.bf16.mxu0 0
          %761 = vmatmul.mubr.bf16.gmra.mxu0 %v672
          %v762 = vpop.f32.mrf.mxu0
          %v763 = vadd.f32 %v654, %v762
          %v764 = vpop.f32.mrf.mxu0
          %v765 = vpop.f32.mrf.mxu0
          %v766 = vadd.f32 %v654, %v765
          %v767 = vpop.f32.mrf.mxu0
          %768 = vmatprep.mubr.bf16.mxu0 0
          %769 = vmatmul.mubr.bf16.gmra.mxu0 %v673
          %v770 = vpop.f32.mrf.mxu0
          %v771 = vadd.f32 %v654, %v770
          %v772 = vpop.f32.mrf.mxu0
          %v773 = vpop.f32.mrf.mxu0
          %v774 = vadd.f32 %v654, %v773
          %v775 = vpop.f32.mrf.mxu0
          %776 = vmatprep.mubr.bf16.mxu0 0
          %777 = vmatmul.mubr.bf16.gmra.mxu0 %v674
          %v778 = vpop.f32.mrf.mxu0
          %v779 = vadd.f32 %v654, %v778
          %v780 = vpop.f32.mrf.mxu0
          %v781 = vpop.f32.mrf.mxu0
          %v782 = vadd.f32 %v654, %v781
          %v783 = vpop.f32.mrf.mxu0
          %784 = vmatprep.mubr.bf16.mxu0 0
          %785 = vmatmul.mubr.bf16.gmra.mxu0 %v675
          %v786 = vpop.f32.mrf.mxu0
          %v787 = vadd.f32 %v654, %v786
          %v788 = vpop.f32.mrf.mxu0
          %v789 = vpop.f32.mrf.mxu0
          %v790 = vadd.f32 %v654, %v789
          %v791 = vpop.f32.mrf.mxu0
          %792 = vdwg.mxu0
          %v793 = vtanh.pop %v763
          %v794 = vtanh.pop %v766
          %v795 = vtanh.pop %v771
          %v796 = vtanh.pop %v774
          %v797 = vtanh.pop %v779
          %v798 = vtanh.pop %v782
          %v799 = vtanh.pop %v787
          %v800 = vtanh.pop %v790
          %v801 = vld [vmem:[%s611] sm:$0xff]
          %v802 = vld [vmem:[%s611 + $0x8] sm:$0xff]
          %v803 = vld [vmem:[%s611 + $0x10] sm:$0xff]
          %v804 = vld [vmem:[%s611 + $0x18] sm:$0xff]
          %v805 = vld [vmem:[%s611 + $0x20] sm:$0xff]
          %v806 = vld [vmem:[%s611 + $0x28] sm:$0xff]
          %v807 = vld [vmem:[%s611 + $0x30] sm:$0xff]
          %v808 = vld [vmem:[%s611 + $0x38] sm:$0xff]
          %v809 = vmul.f32 %v793, %v801
          %v810 = vmul.f32 %v794, %v802
          %v811 = vmul.f32 %v795, %v803
          %v812 = vmul.f32 %v796, %v804
          %v813 = vmul.f32 %v797, %v805
          %v814 = vmul.f32 %v798, %v806
          %v815 = vmul.f32 %v799, %v807
          %v816 = vmul.f32 %v800, %v808
          %v817 = vpack.c.bf16 %v810, %v809
          %v818 = vpack.c.bf16 %v812, %v811
          %v819 = vpack.c.bf16 %v814, %v813
          %v820 = vpack.c.bf16 %v816, %v815
          %v825 = vunpack.c.l.b16 %v817
          %v826 = vunpack.c.h.b16 %v817
          %v827 = vunpack.c.l.b16 %v818
          %v828 = vunpack.c.h.b16 %v818
          %v829 = vunpack.c.l.b16 %v819
          %v830 = vunpack.c.h.b16 %v819
          %v831 = vunpack.c.l.b16 %v820
          %v832 = vunpack.c.h.b16 %v820
          %v833 = vpack.c.b16 %v825, %v825
          %v834 = vpack.c.b16 %v826, %v826
          %v835 = vpack.c.b16 %v827, %v827
          %v836 = vpack.c.b16 %v828, %v828
          %v837 = vpack.c.b16 %v829, %v829
          %v838 = vpack.c.b16 %v830, %v830
          %v839 = vpack.c.b16 %v831, %v831
          %v840 = vpack.c.b16 %v832, %v832
          %849 = vst [vmem:[#allocation2] sm:$0xf] %v833
          %850 = vst [vmem:[#allocation2 + $0x4] sm:$0xf] %v834
          %851 = vst [vmem:[#allocation2 + $0x8] sm:$0xf] %v835
          %852 = vst [vmem:[#allocation2 + $0xc] sm:$0xf] %v836
          %853 = vst [vmem:[#allocation2 + $0x10] sm:$0xf] %v837
          %854 = vst [vmem:[#allocation2 + $0x14] sm:$0xf] %v838
          %855 = vst [vmem:[#allocation2 + $0x18] sm:$0xf] %v839
          %856 = vst [vmem:[#allocation2 + $0x1c] sm:$0xf] %v840
          %857 = vst [vmem:[#allocation3] sm:$0xff] 0.0
          %858 = vst [vmem:[#allocation3 + $0x8] sm:$0xff] 0.0
          %859 = vst [vmem:[#allocation3 + $0x10] sm:$0xff] 0.0
          %860 = vst [vmem:[#allocation3 + $0x18] sm:$0xff] 0.0
          %861 = vst [vmem:[#allocation3 + $0x20] sm:$0xff] 0.0
          %862 = vst [vmem:[#allocation3 + $0x28] sm:$0xff] 0.0
          %863 = vst [vmem:[#allocation3 + $0x30] sm:$0xff] 0.0
          %864 = vst [vmem:[#allocation3 + $0x38] sm:$0xff] 0.0
        $region131: #{run.1} parent=118 // pred_fallthru
          _
        %v865 = vld [vmem:[#allocation2] sm:$0xf]
        %v866 = vld [vmem:[#allocation2 + $0x4] sm:$0xf]
        %v867 = vld [vmem:[#allocation2 + $0x8] sm:$0xf]
        %v868 = vld [vmem:[#allocation2 + $0xc] sm:$0xf]
        %v869 = vld [vmem:[#allocation2 + $0x10] sm:$0xf]
        %v870 = vld [vmem:[#allocation2 + $0x14] sm:$0xf]
        %v871 = vld [vmem:[#allocation2 + $0x18] sm:$0xf]
        %v872 = vld [vmem:[#allocation2 + $0x1c] sm:$0xf]
        %v873 = vld [vmem:[%s517] sm:$0xf]
        %v874 = vld [vmem:[%s517 + $0x4] sm:$0xf]
        %v875 = vld [vmem:[%s517 + $0x8] sm:$0xf]
        %v876 = vld [vmem:[%s517 + $0xc] sm:$0xf]
        %v877 = vld [vmem:[%s517 + $0x10] sm:$0xf]
        %v878 = vld [vmem:[%s517 + $0x14] sm:$0xf]
        %v879 = vld [vmem:[%s517 + $0x18] sm:$0xf]
        %v880 = vld [vmem:[%s517 + $0x1c] sm:$0xf]
        %v881 = vld [vmem:[%s517 + $0x20] sm:$0xf]
        %v882 = vld [vmem:[%s517 + $0x24] sm:$0xf]
        %v883 = vld [vmem:[%s517 + $0x28] sm:$0xf]
        %v884 = vld [vmem:[%s517 + $0x2c] sm:$0xf]
        %v885 = vld [vmem:[%s517 + $0x30] sm:$0xf]
        %v886 = vld [vmem:[%s517 + $0x34] sm:$0xf]
        %v887 = vld [vmem:[%s517 + $0x38] sm:$0xf]
        %v888 = vld [vmem:[%s517 + $0x3c] sm:$0xf]
        %v889 = vld [vmem:[%s602] sm:$0x1]
        %v891 = vlaneseq
        %v892 = vshrl.u32 %v891, 7
        %v893 = vsub.s32 0, %v892
        %v894 = vrot.slane %v889, %v893
        %v904 = vunpack.c.l.b16 %v865
        %v905 = vunpack.c.l.b16 %v866
        %v906 = vunpack.c.l.b16 %v867
        %v907 = vunpack.c.l.b16 %v868
        %v908 = vunpack.c.l.b16 %v869
        %v909 = vunpack.c.l.b16 %v870
        %v910 = vunpack.c.l.b16 %v871
        %v911 = vunpack.c.l.b16 %v872
        %v912 = vpack.c.b16 %v905, %v904
        %v913 = vpack.c.b16 %v907, %v906
        %v914 = vpack.c.b16 %v909, %v908
        %v915 = vpack.c.b16 %v911, %v910
        %v936 = vunpack.c.l.b16 %v873
        %v937 = vunpack.c.l.b16 %v874
        %v938 = vunpack.c.l.b16 %v875
        %v939 = vunpack.c.l.b16 %v876
        %v940 = vunpack.c.l.b16 %v877
        %v941 = vunpack.c.l.b16 %v878
        %v942 = vunpack.c.l.b16 %v879
        %v943 = vunpack.c.l.b16 %v880
        %v944 = vunpack.c.l.b16 %v881
        %v945 = vunpack.c.l.b16 %v882
        %v946 = vunpack.c.l.b16 %v883
        %v947 = vunpack.c.l.b16 %v884
        %v948 = vunpack.c.l.b16 %v885
        %v949 = vunpack.c.l.b16 %v886
        %v950 = vunpack.c.l.b16 %v887
        %v951 = vunpack.c.l.b16 %v888
        %v952 = vpack.c.b16 %v937, %v936
        %v953 = vpack.c.b16 %v939, %v938
        %v954 = vpack.c.b16 %v941, %v940
        %v955 = vpack.c.b16 %v943, %v942
        %v956 = vpack.c.b16 %v945, %v944
        %v957 = vpack.c.b16 %v947, %v946
        %v958 = vpack.c.b16 %v949, %v948
        %v959 = vpack.c.b16 %v951, %v950
        %968 = vmatprep.subr.bf16.mxu0 0
        %969 = vmatpush1.bf16.msra.mxu0 %v959
        %970 = vmatprep.subr.bf16.mxu0 0
        %971 = vmatpush1.bf16.msra.mxu0 %v958
        %972 = vmatprep.subr.bf16.mxu0 0
        %973 = vmatpush1.bf16.msra.mxu0 %v957
        %974 = vmatprep.subr.bf16.mxu0 0
        %975 = vmatpush1.bf16.msra.mxu0 %v956
        %976 = vmatprep.subr.bf16.mxu0 0
        %977 = vmatpush1.bf16.msra.mxu0 %v955
        %978 = vmatprep.subr.bf16.mxu0 0
        %979 = vmatpush1.bf16.msra.mxu0 %v954
        %980 = vmatprep.subr.bf16.mxu0 0
        %981 = vmatpush1.bf16.msra.mxu0 %v953
        %982 = vmatprep.subr.bf16.mxu0 0
        %983 = vmatpush1.bf16.msra.mxu0 %v952
        %984 = vmatprep.subr.bf16.mxu0 0
        %985 = vmatpush2.bf16.msra.mxu0 0
        %986 = vmatprep.subr.bf16.mxu0 0
        %987 = vmatpush2.bf16.msra.mxu0 0
        %988 = vmatprep.subr.bf16.mxu0 0
        %989 = vmatpush2.bf16.msra.mxu0 0
        %990 = vmatprep.subr.bf16.mxu0 0
        %991 = vmatpush2.bf16.msra.mxu0 0
        %992 = vmatprep.subr.bf16.mxu0 0
        %993 = vmatpush2.bf16.msra.mxu0 0
        %994 = vmatprep.subr.bf16.mxu0 0
        %995 = vmatpush2.bf16.msra.mxu0 0
        %996 = vmatprep.subr.bf16.mxu0 0
        %997 = vmatpush2.bf16.msra.mxu0 0
        %998 = vmatprep.subr.bf16.mxu0 0
        %999 = vmatpush2.bf16.msra.mxu0 0
        %1000 = vmatprep.mubr.bf16.mxu0 0
        %1001 = vmatmul.mubr.bf16.gmra.mxu0 %v912
        %v1002 = vpop.f32.mrf.mxu0
        %v1003 = vadd.f32 %v894, %v1002
        %v1004 = vpop.f32.mrf.mxu0
        %v1005 = vpop.f32.mrf.mxu0
        %v1006 = vadd.f32 %v894, %v1005
        %v1007 = vpop.f32.mrf.mxu0
        %1008 = vmatprep.mubr.bf16.mxu0 0
        %1009 = vmatmul.mubr.bf16.gmra.mxu0 %v913
        %v1010 = vpop.f32.mrf.mxu0
        %v1011 = vadd.f32 %v894, %v1010
        %v1012 = vpop.f32.mrf.mxu0
        %v1013 = vpop.f32.mrf.mxu0
        %v1014 = vadd.f32 %v894, %v1013
        %v1015 = vpop.f32.mrf.mxu0
        %1016 = vmatprep.mubr.bf16.mxu0 0
        %1017 = vmatmul.mubr.bf16.gmra.mxu0 %v914
        %v1018 = vpop.f32.mrf.mxu0
        %v1019 = vadd.f32 %v894, %v1018
        %v1020 = vpop.f32.mrf.mxu0
        %v1021 = vpop.f32.mrf.mxu0
        %v1022 = vadd.f32 %v894, %v1021
        %v1023 = vpop.f32.mrf.mxu0
        %1024 = vmatprep.mubr.bf16.mxu0 0
        %1025 = vmatmul.mubr.bf16.gmra.mxu0 %v915
        %v1026 = vpop.f32.mrf.mxu0
        %v1027 = vadd.f32 %v894, %v1026
        %v1028 = vpop.f32.mrf.mxu0
        %v1029 = vpop.f32.mrf.mxu0
        %v1030 = vadd.f32 %v894, %v1029
        %v1031 = vpop.f32.mrf.mxu0
        %1032 = vdwg.mxu0
        %v1033 = vlaneseq
        %v1034 = vshrl.u32 %v1033, 7
        %v1035 = vadd.s32 %v1034, 8
        %v1036 = vadd.s32 %v1034, 16
        %v1037 = vadd.s32 %v1034, 24
        %v1038 = vadd.s32 %v1034, 32
        %v1039 = vadd.s32 %v1034, 40
        %v1040 = vadd.s32 %v1034, 48
        %v1041 = vadd.s32 %v1034, 56
        %s1042 = smul.u32 %s24, 64
        %v1043 = vstv %s1042
        %v1044 = vadd.s32 %v1034, %v1043
        %v1045 = vadd.s32 %v1035, %v1043
        %v1046 = vadd.s32 %v1036, %v1043
        %v1047 = vadd.s32 %v1037, %v1043
        %v1048 = vadd.s32 %v1038, %v1043
        %v1049 = vadd.s32 %v1039, %v1043
        %v1050 = vadd.s32 %v1040, %v1043
        %v1051 = vadd.s32 %v1041, %v1043
        %vm1052 = vcmp.lt.s32.totalorder %v1044, 50
        %vm1053 = vcmp.lt.s32.totalorder %v1045, 50
        %vm1054 = vcmp.lt.s32.totalorder %v1046, 50
        %vm1055 = vcmp.lt.s32.totalorder %v1047, 50
        %vm1056 = vcmp.lt.s32.totalorder %v1048, 50
        %vm1057 = vcmp.lt.s32.totalorder %v1049, 50
        %vm1058 = vcmp.lt.s32.totalorder %v1050, 50
        %vm1059 = vcmp.lt.s32.totalorder %v1051, 50
        %v1060 = vsel %vm1052, 1, 0
        %v1061 = vsel %vm1053, 1, 0
        %v1062 = vsel %vm1054, 1, 0
        %v1063 = vsel %vm1055, 1, 0
        %v1064 = vsel %vm1056, 1, 0
        %v1065 = vsel %vm1057, 1, 0
        %v1066 = vsel %vm1058, 1, 0
        %v1067 = vsel %vm1059, 1, 0
        %v1068 = vcvt.s32.f32 %v1060
        %v1069 = vcvt.s32.f32 %v1061
        %v1070 = vcvt.s32.f32 %v1062
        %v1071 = vcvt.s32.f32 %v1063
        %v1072 = vcvt.s32.f32 %v1064
        %v1073 = vcvt.s32.f32 %v1065
        %v1074 = vcvt.s32.f32 %v1066
        %v1075 = vcvt.s32.f32 %v1067
        %v1076 = vld [vmem:[#allocation3] sm:$0xff]
        %v1077 = vld [vmem:[#allocation3 + $0x8] sm:$0xff]
        %v1078 = vld [vmem:[#allocation3 + $0x10] sm:$0xff]
        %v1079 = vld [vmem:[#allocation3 + $0x18] sm:$0xff]
        %v1080 = vld [vmem:[#allocation3 + $0x20] sm:$0xff]
        %v1081 = vld [vmem:[#allocation3 + $0x28] sm:$0xff]
        %v1082 = vld [vmem:[#allocation3 + $0x30] sm:$0xff]
        %v1083 = vld [vmem:[#allocation3 + $0x38] sm:$0xff]
        %v1084 = vld [vmem:[%s510] sm:$0xff]
        %v1085 = vld [vmem:[%s510 + $0x8] sm:$0xff]
        %v1086 = vld [vmem:[%s510 + $0x10] sm:$0xff]
        %v1087 = vld [vmem:[%s510 + $0x18] sm:$0xff]
        %v1088 = vld [vmem:[%s510 + $0x20] sm:$0xff]
        %v1089 = vld [vmem:[%s510 + $0x28] sm:$0xff]
        %v1090 = vld [vmem:[%s510 + $0x30] sm:$0xff]
        %v1091 = vld [vmem:[%s510 + $0x38] sm:$0xff]
        %v1092 = vsub.f32 %v1003, %v1084
        %v1093 = vsub.f32 %v1006, %v1085
        %v1094 = vsub.f32 %v1011, %v1086
        %v1095 = vsub.f32 %v1014, %v1087
        %v1096 = vsub.f32 %v1019, %v1088
        %v1097 = vsub.f32 %v1022, %v1089
        %v1098 = vsub.f32 %v1027, %v1090
        %v1099 = vsub.f32 %v1030, %v1091
        %v1100 = vand.u32 2147483647, %v1092
        %v1101 = vand.u32 2147483647, %v1093
        %v1102 = vand.u32 2147483647, %v1094
        %v1103 = vand.u32 2147483647, %v1095
        %v1104 = vand.u32 2147483647, %v1096
        %v1105 = vand.u32 2147483647, %v1097
        %v1106 = vand.u32 2147483647, %v1098
        %v1107 = vand.u32 2147483647, %v1099
        %v1108 = vmul.f32 %v1100, %v1068
        %v1109 = vmul.f32 %v1101, %v1069
        %v1110 = vmul.f32 %v1102, %v1070
        %v1111 = vmul.f32 %v1103, %v1071
        %v1112 = vmul.f32 %v1104, %v1072
        %v1113 = vmul.f32 %v1105, %v1073
        %v1114 = vmul.f32 %v1106, %v1074
        %v1115 = vmul.f32 %v1107, %v1075
        %v1116 = vadd.f32 %v1076, %v1108
        %v1117 = vadd.f32 %v1077, %v1109
        %v1118 = vadd.f32 %v1078, %v1110
        %v1119 = vadd.f32 %v1079, %v1111
        %v1120 = vadd.f32 %v1080, %v1112
        %v1121 = vadd.f32 %v1081, %v1113
        %v1122 = vadd.f32 %v1082, %v1114
        %v1123 = vadd.f32 %v1083, %v1115
        %1124 = vst [vmem:[#allocation3] sm:$0xff] %v1116
        %1125 = vst [vmem:[#allocation3 + $0x8] sm:$0xff] %v1117
        %1126 = vst [vmem:[#allocation3 + $0x10] sm:$0xff] %v1118
        %1127 = vst [vmem:[#allocation3 + $0x18] sm:$0xff] %v1119
        %1128 = vst [vmem:[#allocation3 + $0x20] sm:$0xff] %v1120
        %1129 = vst [vmem:[#allocation3 + $0x28] sm:$0xff] %v1121
        %1130 = vst [vmem:[#allocation3 + $0x30] sm:$0xff] %v1122
        %1131 = vst [vmem:[#allocation3 + $0x38] sm:$0xff] %v1123
        %p1132 = scmp.eq.s32.totalorder %s25, 2
        // Predicated region
        $region132: #{run.1} parent=118 // pred_check
          %p1133 = pneg %p1132
        $region133: #{run.1} parent=118 // pred_check_branch
          %1135 = sbr.rel (%p1133) target = $region135
        $region134: #{run.1} parent=118 // pred_region
          %v1136 = vld [vmem:[#allocation3] sm:$0xff]
          %v1137 = vld [vmem:[#allocation3 + $0x8] sm:$0xff]
          %v1138 = vld [vmem:[#allocation3 + $0x10] sm:$0xff]
          %v1139 = vld [vmem:[#allocation3 + $0x18] sm:$0xff]
          %v1140 = vld [vmem:[#allocation3 + $0x20] sm:$0xff]
          %v1141 = vld [vmem:[#allocation3 + $0x28] sm:$0xff]
          %v1142 = vld [vmem:[#allocation3 + $0x30] sm:$0xff]
          %v1143 = vld [vmem:[#allocation3 + $0x38] sm:$0xff]
          %v1144 = vadd.f32 %v1136, %v1137
          %v1145 = vadd.f32 %v1144, %v1138
          %v1146 = vadd.f32 %v1145, %v1139
          %v1147 = vadd.f32 %v1146, %v1140
          %v1148 = vadd.f32 %v1147, %v1141
          %v1149 = vadd.f32 %v1148, %v1142
          %v1150 = vadd.f32 %v1149, %v1143
          %1151 = vst [vmem:[%s619] sm:$0xff] %v1150
        $region135: #{run.1} parent=118 // pred_fallthru
          _
        %p1152 = scmp.lt.s32.totalorder %s23, 2
        %s1153 = scalar_select %p1152, %s23, 2
        %p1154 = scmp.lt.s32.totalorder %s24, 0
        %s1155 = scalar_select %p1154, %s24, 0
        %s1156 = sadd.s32 %s1155, %s1153
        %s1157 = smul.addr %s1156, 8
        %s1158 = scalar_lea.vmem %s7, %s1157
        // Predicated region
        $region136: #{run.1} parent=118 // pred_check
          %p1159 = pneg %p247
        $region137: #{run.1} parent=118 // pred_check_branch
          %1161 = sbr.rel (%p1159) target = $region139
        $region138: #{run.1} parent=118 // pred_region
          _
        $region139: #{run.1} parent=118 // pred_fallthru
          _
      $region119: #{run.1} parent=5 // pred_fallthru
        _
      %p1162 = scmp.le.s32.totalorder 2, %s13
      // Predicated region
      $region140: #{run.1} parent=5 // pred_check
        %p1163 = pneg %p1162
      $region141: #{run.1} parent=5 // pred_check_branch
        %1165 = sbr.rel (%p1163) target = $region143
      $region142: #{run.1} parent=5 // pred_region
        %s1166 = ssub.s32 %s13, 2
        // Predicated region
        $region144: #{run.1} parent=142 // pred_check
          %p1167 = pneg %p253
        $region145: #{run.1} parent=142 // pred_check_branch
          %1169 = sbr.rel (%p1167) target = $region147
        $region146: #{run.1} parent=142 // pred_region
          %p1170 = scmp.lt.s32.totalorder %s26, 2
          %s1171 = scalar_select %p1170, %s26, 2
          %p1172 = scmp.lt.s32.totalorder %s27, 0
          %s1173 = scalar_select %p1172, %s27, 0
          %s1174 = sadd.s32 %s1173, %s1171
          %s1175 = smul.addr %s1174, 8
          %s1176 = scalar_lea.vmem %s7, %s1175
        $region147: #{run.1} parent=142 // pred_fallthru
          _
      $region143: #{run.1} parent=5 // pred_fallthru
        _
    $region6: #{run.1} parent=1 // loop_footer
      %s17 = sadd.s32 1, %s13
    $region7: #{run.1} parent=1 // loop_footer_branch
      %12 = sbr.rel target = $region3
    $region8: #{run.1} parent=1 // loop_exit
      _

</llo_original>
